<compile_context>
chip_gen: v7x
topology: tpu7x:2x2x1
jax: 0.10.0
libtpu: 0.0.40
codegen_flags: <defaults>
</compile_context>

<pallas_src>
import numpy as np
import jax
import jax.numpy as jnp
from jax import lax
from jax.experimental import pallas as pl
from jax.experimental.pallas import tpu as pltpu

F32 = jnp.float32
INV_SQRT2 = float(1.0 / np.sqrt(2.0))
PARALLEL1 = pltpu.CompilerParams(dimension_semantics=("parallel",))


def _gelu(r):
    # exact (erf) GELU, nn.GELU default
    return 0.5 * r * (1.0 + lax.erf(r * INV_SQRT2))


# ---------------------------------------------------------------------------
# parameter-setup helpers (plain numpy, run once at init)
# ---------------------------------------------------------------------------
def avg_pool_matrix(S, s):
    """AvgPool2d(kernel=s, stride=s) along one axis as a (S//s, S) matrix."""
    P = S // s
    M = np.zeros((P, S), np.float32)
    for i in range(P):
        M[i, i * s:(i + 1) * s] = 1.0 / s
    return M


def bilinear_matrix(T, S):
    """F.interpolate(mode='bilinear', align_corners=True) along one axis."""
    M = np.zeros((T, S), np.float32)
    if T == 1 or S == 1:
        M[:, 0] = 1.0
        return M
    for t in range(T):
        pos = t * (S - 1) / (T - 1)
        l = min(int(np.floor(pos)), S - 1)
        frac = pos - l
        M[t, l] += 1.0 - frac
        if frac > 0.0:
            M[t, min(l + 1, S - 1)] += frac
    return M


def resize_matrix_T(Mh, Mw):
    """2-D separable resize as one (Sin, Sout) matrix: flat_out = flat_in @ M."""
    return jnp.asarray(np.kron(Mh, Mw).T)


def build_filter_matrix_small(conv_w, C, G, Kt, bn_scale=None, bn_shift=None):
    """Fold 1x1 conv (+ eval BatchNorm) acting on GAP(x) into (Kt*C, C) / (Kt*C, 1).

    fw[t*C + c] = tanh( (At @ gap)[t*C + c] + b[t*C + c] ) where gap is the
    per-channel global average of x.  Uses the rank structure of the old
    repeated-row matrix (contraction dim is C, not C*h*w).
    """
    Cg = C // G
    if bn_scale is None:
        bn_scale = np.ones(G * Kt, np.float32)
    if bn_shift is None:
        bn_shift = np.zeros(G * Kt, np.float32)
    t_idx = np.repeat(np.arange(Kt), C)           # j = t*C + c  ->  t
    c_idx = np.tile(np.arange(C), Kt)             # j = t*C + c  ->  c
    o_idx = (c_idx // Cg) * Kt + t_idx            # conv output-channel row
    At = conv_w[o_idx, :] * bn_scale[o_idx][:, None]   # (Kt*C, C)
    b = bn_shift[o_idx][:, None]                       # (Kt*C, 1)
    return At.astype(np.float32), b.astype(np.float32)


def expand_fw(fw, C, Kt, rep):
    """fw (N, Kt*C) indexed t*C+c  ->  (N, C*rep, Kt), row = c*rep + r."""
    N = fw.shape[0]
    f = fw.reshape(N, Kt, C).transpose(0, 2, 1)            # (N, C, Kt)
    f = jnp.broadcast_to(f[:, :, None, :], (N, C, rep, Kt))
    return f.reshape(N, C * rep, Kt)


# ---------------------------------------------------------------------------
# Pallas kernels
# ---------------------------------------------------------------------------
def resize_matmul(x2, m2t, add=None, gelu=False):
    """(N*C, Sin) @ (Sin, Sout) resize (pool / bilinear), with fused add/GELU."""
    R, _ = x2.shape
    Sout = m2t.shape[1]
    if add is None:
        def kernel(x_ref, m_ref, o_ref):
            r = jnp.dot(x_ref[...], m_ref[...], preferred_element_type=F32)
            o_ref[...] = _gelu(r) if gelu else r
        args = (x2, m2t)
    else:
        def kernel(x_ref, m_ref, a_ref, o_ref):
            r = jnp.dot(x_ref[...], m_ref[...], preferred_element_type=F32)
            r = r + a_ref[...]
            o_ref[...] = _gelu(r) if gelu else r
        args = (x2, m2t, add)
    return pl.pallas_call(
        kernel, out_shape=jax.ShapeDtypeStruct((R, Sout), F32))(*args)


def conv3x3(x4, w, bias=None, add=None, gelu=False):
    """3x3 conv (stride 1, zero pad 1) as one MXU matmul per batch.

    out = gelu?(W @ patches + bias) + add,  patches = im2col built in glue.
    """
    N, Cin, H, W = x4.shape
    Cout = w.shape[0]
    S = H * W
    xp = jnp.pad(x4, ((0, 0), (0, 0), (1, 1), (1, 1)))
    patches = jnp.stack(
        [xp[:, :, kh:kh + H, kw:kw + W] for kh in range(3) for kw in range(3)],
        axis=2).reshape(N, Cin * 9, S)
    wm = jnp.asarray(w, F32).reshape(Cout, Cin * 9)
    bcol = (jnp.zeros((Cout, 1), F32) if bias is None
            else jnp.asarray(bias, F32).reshape(Cout, 1))

    base_specs = [
        pl.BlockSpec((1, Cin * 9, S), lambda n: (n, 0, 0)),
        pl.BlockSpec((Cout, Cin * 9), lambda n: (0, 0)),
        pl.BlockSpec((Cout, 1), lambda n: (0, 0)),
    ]
    if add is None:
        def kernel(p_ref, w_ref, b_ref, o_ref):
            r = jnp.dot(w_ref[...], p_ref[0], preferred_element_type=F32)
            r = r + b_ref[...]
            o_ref[0] = _gelu(r) if gelu else r
        in_specs, args = base_specs, (patches, wm, bcol)
    else:
        addf = add.reshape(N, Cout, S)
        def kernel(p_ref, w_ref, b_ref, a_ref, o_ref):
            r = jnp.dot(w_ref[...], p_ref[0], preferred_element_type=F32)
            r = r + b_ref[...]
            r = _gelu(r) if gelu else r
            o_ref[0] = r + a_ref[0]
        in_specs = base_specs + [pl.BlockSpec((1, Cout, S), lambda n: (n, 0, 0))]
        args = (patches, wm, bcol, addf)

    out = pl.pallas_call(
        kernel,
        grid=(N,),
        in_specs=in_specs,
        out_specs=pl.BlockSpec((1, Cout, S), lambda n: (n, 0, 0)),
        out_shape=jax.ShapeDtypeStruct((N, Cout, S), F32),
        compiler_params=PARALLEL1,
    )(*args)
    return out.reshape(N, Cout, H, W)


def filter_weights(z4, At, bcol):
    """fw = tanh(At @ GAP(z) + b).  Also returns the per-channel GAP."""
    N, C, H, W = z4.shape
    S = H * W
    M = At.shape[0]
    z2 = z4.reshape(N, C, S)

    def kernel(z_ref, a_ref, b_ref, fw_ref, g_ref):
        g = jnp.mean(z_ref[0], axis=1, keepdims=True)          # (C, 1)
        fw_ref[0] = jnp.tanh(
            jnp.dot(a_ref[...], g, preferred_element_type=F32) + b_ref[...])
        g_ref[0] = g

    fw, g = pl.pallas_call(
        kernel,
        grid=(N,),
        in_specs=[pl.BlockSpec((1, C, S), lambda n: (n, 0, 0)),
                  pl.BlockSpec((M, C), lambda n: (0, 0)),
                  pl.BlockSpec((M, 1), lambda n: (0, 0))],
        out_specs=[pl.BlockSpec((1, M, 1), lambda n: (n, 0, 0)),
                   pl.BlockSpec((1, C, 1), lambda n: (n, 0, 0))],
        out_shape=(jax.ShapeDtypeStruct((N, M, 1), F32),
                   jax.ShapeDtypeStruct((N, C, 1), F32)),
        compiler_params=PARALLEL1,
    )(z2, At, bcol)
    return fw[:, :, 0], g[:, :, 0]


def strip_att_h(xp2, fwH, prmH, K, dil, Wd):
    """spatial_strip_att H=True: taps along W on (C*H, Wp) slabs."""
    N, CH, Wp = xp2.shape

    def kernel(xp_ref, fw_ref, prm_ref, o_ref):
        xp = xp_ref[0]
        fw = fw_ref[0]
        xi = xp[:, dil:dil + Wd]                       # interior = identity input
        acc = xp[:, 0:Wd] * fw[:, 0:1]
        for t in range(1, K):
            acc = acc + xp[:, t * dil:t * dil + Wd] * fw[:, t:t + 1]
        gap = jnp.mean(xi, axis=1, keepdims=True)       # AdaptiveAvgPool2d((None,1))
        ia, ll, lh = prm_ref[:, 0:1], prm_ref[:, 1:2], prm_ref[:, 2:3]
        o_ref[0] = (acc * (ia + 1.0) - ia * gap) * ll + xi * (lh + 1.0)

    return pl.pallas_call(
        kernel,
        grid=(N,),
        in_specs=[pl.BlockSpec((1, CH, Wp), lambda n: (n, 0, 0)),
                  pl.BlockSpec((1, CH, K), lambda n: (n, 0, 0)),
                  pl.BlockSpec((CH, 3), lambda n: (0, 0))],
        out_specs=pl.BlockSpec((1, CH, Wd), lambda n: (n, 0, 0)),
        out_shape=jax.ShapeDtypeStruct((N, CH, Wd), F32),
        compiler_params=PARALLEL1,
    )(xp2, fwH, prmH)


def strip_att_w_fused(xp2, zt2, fwW, prmW, K, dil, Hd):
    """spatial_strip_att H=False (taps along H, transposed layout), fused with
    the cubic_attention gamma/beta mix: out = gamma * att + z * beta."""
    N, CW, Hp = xp2.shape

    def kernel(xp_ref, zt_ref, fw_ref, prm_ref, o_ref):
        xp = xp_ref[0]
        fw = fw_ref[0]
        xi = xp[:, dil:dil + Hd]
        acc = xp[:, 0:Hd] * fw[:, 0:1]
        for t in range(1, K):
            acc = acc + xp[:, t * dil:t * dil + Hd] * fw[:, t:t + 1]
        gap = jnp.mean(xi, axis=1, keepdims=True)       # AdaptiveAvgPool2d((1,None))
        ia, ll, lh = prm_ref[:, 0:1], prm_ref[:, 1:2], prm_ref[:, 2:3]
        gamma, beta = prm_ref[:, 3:4], prm_ref[:, 4:5]
        att = (acc * (ia + 1.0) - ia * gap) * ll + xi * (lh + 1.0)
        o_ref[0] = gamma * att + zt_ref[0] * beta

    return pl.pallas_call(
        kernel,
        grid=(N,),
        in_specs=[pl.BlockSpec((1, CW, Hp), lambda n: (n, 0, 0)),
                  pl.BlockSpec((1, CW, Hd), lambda n: (n, 0, 0)),
                  pl.BlockSpec((1, CW, K), lambda n: (n, 0, 0)),
                  pl.BlockSpec((CW, 5), lambda n: (0, 0))],
        out_specs=pl.BlockSpec((1, CW, Hd), lambda n: (n, 0, 0)),
        out_shape=jax.ShapeDtypeStruct((N, CW, Hd), F32),
        compiler_params=PARALLEL1,
    )(xp2, zt2, fwW, prmW)


def square_att_fused(taps, x1_2, fwS, gsq, prmS):
    """dynamic_filter (KxK square dynamic filter) on pre-unfolded taps,
    fused with the final '+ x1' of MultiShapeKernel."""
    N, T, CH, Wd = taps.shape

    def kernel(tp_ref, x1_ref, fw_ref, g_ref, prm_ref, o_ref):
        fw = fw_ref[0]
        acc = tp_ref[0, 0] * fw[:, 0:1]
        for t in range(1, T):
            acc = acc + tp_ref[0, t] * fw[:, t:t + 1]
        xi = tp_ref[0, T // 2]                           # center tap == identity input
        gap = g_ref[0]                                   # AdaptiveAvgPool2d(1), precomputed
        ia, ll, lh = prm_ref[:, 0:1], prm_ref[:, 1:2], prm_ref[:, 2:3]
        o_ref[0] = (acc * (ia + 1.0) - ia * gap) * ll + xi * (lh + 1.0) + x1_ref[0]

    return pl.pallas_call(
        kernel,
        grid=(N,),
        in_specs=[pl.BlockSpec((1, T, CH, Wd), lambda n: (n, 0, 0, 0)),
                  pl.BlockSpec((1, CH, Wd), lambda n: (n, 0, 0)),
                  pl.BlockSpec((1, CH, T), lambda n: (n, 0, 0)),
                  pl.BlockSpec((1, CH, 1), lambda n: (n, 0, 0)),
                  pl.BlockSpec((CH, 3), lambda n: (0, 0))],
        out_specs=pl.BlockSpec((1, CH, Wd), lambda n: (n, 0, 0)),
        out_shape=jax.ShapeDtypeStruct((N, CH, Wd), F32),
        compiler_params=PARALLEL1,
    )(taps, x1_2, fwS, gsq, prmS)


# ---------------------------------------------------------------------------
# module forward (glue orchestration of the kernels)
# ---------------------------------------------------------------------------
def multishape_forward(z4, lvl, dil, K=3):
    N, C, h, w = z4.shape
    # dynamic-filter weights for H-strip and square filter (shared GAP, one matmul)
    fw_hs, gap_z = filter_weights(z4, lvl['At_hs'], lvl['b_hs'])
    fw_h, fw_s = fw_hs[:, :K * C], fw_hs[:, K * C:]

    # cubic_attention: H strip (taps along W)
    zpW = jnp.pad(z4, ((0, 0), (0, 0), (0, 0), (dil, dil)), mode='reflect')
    out_h2 = strip_att_h(zpW.reshape(N, C * h, w + 2 * dil),
                         expand_fw(fw_h, C, K, h), lvl['prmH'], K, dil, w)
    out_h4 = out_h2.reshape(N, C, h, w)

    # cubic_attention: W strip (taps along H) + gamma/beta mix with z
    fw_w, _ = filter_weights(out_h4, lvl['At_w'], lvl['b_w'])
    opH = jnp.pad(out_h4, ((0, 0), (0, 0), (dil, dil), (0, 0)), mode='reflect')
    opH_t = opH.transpose(0, 1, 3, 2).reshape(N, C * w, h + 2 * dil)
    zT = z4.transpose(0, 1, 3, 2).reshape(N, C * w, h)
    x1_t = strip_att_w_fused(opH_t, zT, expand_fw(fw_w, C, K, w),
                             lvl['prmW'], K, dil, h)
    x1_4 = x1_t.reshape(N, C, w, h).transpose(0, 1, 3, 2)

    # dynamic_filter (square taps), fused with '+ x1'
    zp2 = jnp.pad(z4, ((0, 0), (0, 0), (dil, dil), (dil, dil)), mode='reflect')
    taps = jnp.stack([zp2[:, :, kh * dil:kh * dil + h, kw * dil:kw * dil + w]
                      for kh in range(K) for kw in range(K)], axis=1)
    gsq = jnp.broadcast_to(gap_z[:, :, None], (N, C, h)).reshape(N, C * h, 1)
    out2 = square_att_fused(taps.reshape(N, K * K, C * h, w),
                            x1_4.reshape(N, C * h, w),
                            expand_fw(fw_s, C, K * K, h), gsq, lvl['prmS'])
    return out2.reshape(N, C, h, w)


def deep_pool_layer(x4, p):
    N, C, H, W = x4.shape
    xf = x4.reshape(N * C, H * W)
    resl_f = xf
    y_up_f = None
    n_lvl = len(p['pools_sizes'])
    for i, s in enumerate(p['pools_sizes']):
        h, w = H // s, W // s
        pooled_f = resize_matmul(xf, p['pool_M'][i],
                                 add=(y_up_f if i > 0 else None))
        z4 = conv3x3(pooled_f.reshape(N, C, h, w), p['conv_w'][i])
        y4 = multishape_forward(z4, p['dyna'][i], p['dilations'][i])
        yf = y4.reshape(N * C, h * w)
        last = (i == n_lvl - 1)
        # resl += bilinear_up(y);  GELU of the reference fused into the last add
        resl_f = resize_matmul(yf, p['up_full_M'][i], add=resl_f, gelu=last)
        if not last:
            y_up_f = resize_matmul(yf, p['up2_M'][i])
    return conv3x3(resl_f.reshape(N, C, H, W), p['conv_sum_w'])


def res_block_forward(x, rp, use_filter):
    h1 = conv3x3(x, rp['w1'], bias=rp['b1'], gelu=True)      # BasicConv relu=True
    h2 = deep_pool_layer(h1, rp['dpl']) if use_filter else h1
    return conv3x3(h2, rp['w2'], bias=rp['b2'], add=x)        # BasicConv + residual


def dblock_forward(x, params):
    res = params['res']
    for r, rp in enumerate(res):
        x = res_block_forward(x, rp, use_filter=(r == len(res) - 1))
    return x


# ---------------------------------------------------------------------------
# parameter init
# ---------------------------------------------------------------------------
def init_deep_pool_params(rnd, C, C_out, H, W):
    pools_sizes = [8, 4, 2]
    dilations = [3, 7, 9]
    K, G = 3, 8
    p = {'pools_sizes': pools_sizes, 'dilations': dilations,
         'conv_w': [], 'pool_M': [], 'up_full_M': [], 'up2_M': [], 'dyna': []}
    n_lvl = len(pools_sizes)
    for i, s in enumerate(pools_sizes):
        h, w = H // s, W // s
        p['conv_w'].append(rnd((C, C, 3, 3)))
        p['pool_M'].append(resize_matrix_T(avg_pool_matrix(H, s), avg_pool_matrix(W, s)))
        p['up_full_M'].append(resize_matrix_T(bilinear_matrix(H, h), bilinear_matrix(W, w)))
        p['up2_M'].append(resize_matrix_T(bilinear_matrix(2 * h, h), bilinear_matrix(2 * w, w))
                          if i != n_lvl - 1 else None)

        lvl = {}
        # spatial_strip_att (H=True): 1x1 conv on GAP, no bias/BN
        conv_h = np.asarray(rnd((G * K, C)))
        At_h, b_h = build_filter_matrix_small(conv_h, C, G, K)
        # dynamic_filter (square): 1x1 conv on GAP + eval-mode BN folded
        conv_s = np.asarray(rnd((G * K * K, C)))
        bn_gamma = 1.0 + np.asarray(rnd((G * K * K,), 0.1))
        bn_beta = np.asarray(rnd((G * K * K,), 0.1))
        bn_mean = np.asarray(rnd((G * K * K,), 0.1))
        bn_var = 1.0 + np.abs(np.asarray(rnd((G * K * K,), 0.1)))
        bn_scale = (bn_gamma / np.sqrt(bn_var + 1e-5)).astype(np.float32)
        bn_shift = (bn_beta - bn_mean * bn_scale).astype(np.float32)
        At_s, b_s = build_filter_matrix_small(conv_s, C, G, K * K, bn_scale, bn_shift)
        lvl['At_hs'] = jnp.asarray(np.concatenate([At_h, At_s], axis=0))
        lvl['b_hs'] = jnp.asarray(np.concatenate([b_h, b_s], axis=0))
        # spatial_strip_att (H=False)
        conv_wdir = np.asarray(rnd((G * K, C)))
        At_w, b_w = build_filter_matrix_small(conv_wdir, C, G, K)
        lvl['At_w'], lvl['b_w'] = jnp.asarray(At_w), jnp.asarray(b_w)
        # per-channel parameters, pre-expanded to the kernels' row layouts
        ia_h, ll_h, lh_h = (np.asarray(rnd((C,))) for _ in range(3))
        lvl['prmH'] = jnp.asarray(np.repeat(np.stack([ia_h, ll_h, lh_h], 1), h, axis=0))
        ia_w, ll_w, lh_w = (np.asarray(rnd((C,))) for _ in range(3))
        gamma = np.asarray(rnd((C,)))
        beta = 1.0 + np.asarray(rnd((C,)))
        lvl['prmW'] = jnp.asarray(
            np.repeat(np.stack([ia_w, ll_w, lh_w, gamma, beta], 1), w, axis=0))
        ia_s, ll_s, lh_s = (np.asarray(rnd((C,))) for _ in range(3))
        lvl['prmS'] = jnp.asarray(np.repeat(np.stack([ia_s, ll_s, lh_s], 1), h, axis=0))
        p['dyna'].append(lvl)
    p['conv_sum_w'] = rnd((C_out, C, 3, 3))
    return p


def init_dblock_params(key, C, H, W, num_res):
    keys = iter(jax.random.split(key, 1024))

    def rnd(shape, scale=0.2):
        return scale * jax.random.normal(next(keys), shape, dtype=F32)

    res = []
    for r in range(num_res):
        rp = {'w1': rnd((C, C, 3, 3)), 'b1': rnd((C,), 0.05),
              'w2': rnd((C, C, 3, 3)), 'b2': rnd((C,), 0.05)}
        if r == num_res - 1:      # only the last ResBlock has the DeepPoolLayer
            rp['dpl'] = init_deep_pool_params(rnd, C, C, H, W)
        res.append(rp)
    return {'res': res}


if __name__ == "__main__":
    key = jax.random.PRNGKey(0)
    # channel must be divisible by group=8, spatial by pool size 8.
    N, C, H, W = 2, 8, 32, 32
    NUM_RES = 2   # DBlock default is num_res=8; 2 (last one filtered) keeps the demo small.
    kx, kp = jax.random.split(key)
    x = jax.random.normal(kx, (N, C, H, W), dtype=F32)
    params = init_dblock_params(kp, C, H, W, NUM_RES)

    out = dblock_forward(x, params)
    out = jax.block_until_ready(out)

    assert out.shape == (N, C, H, W), out.shape
    assert bool(jnp.all(jnp.isfinite(out)))
    print("KERNEL_OK")
</pallas_src>

<mosaic_0001>
module attributes {stable_mosaic.version = 11 : i64} {
  func.func @kernel(%arg0: i32, %arg1: memref<1x72x1024xf32, #tpu.memory_space<vmem>>, %arg2: memref<8x72xf32, #tpu.memory_space<vmem>>, %arg3: memref<8x1xf32, #tpu.memory_space<vmem>>, %arg4: memref<1x8x1024xf32, #tpu.memory_space<vmem>>) attributes {dimension_semantics = [#tpu.dimension_semantics<parallel>], iteration_bounds = array<i64: 2>, scalar_prefetch = 0 : i64, scratch_operands = 0 : i64, tpu.core_type = #tpu.core_type<tc>, window_params = [{transform_indices = @transform_0, window_bounds = array<i64: 1, 72, 1024>}, {pipeline_mode = #tpu.pipeline_mode<synchronous>, transform_indices = @transform_1, window_bounds = array<i64: 8, 72>}, {pipeline_mode = #tpu.pipeline_mode<synchronous>, transform_indices = @transform_2, window_bounds = array<i64: 8, 1>}, {transform_indices = @transform_3, window_bounds = array<i64: 1, 8, 1024>}]} {
    %c0 = arith.constant 0 : index
    %c0_0 = arith.constant 0 : index
    %0 = vector.load %arg2[%c0, %c0_0] : memref<8x72xf32, #tpu.memory_space<vmem>>, vector<8x72xf32>
    %c0_1 = arith.constant 0 : index
    %c0_2 = arith.constant 0 : index
    %c0_3 = arith.constant 0 : index
    %1 = vector.load %arg1[%c0_1, %c0_2, %c0_3] : memref<1x72x1024xf32, #tpu.memory_space<vmem>>, vector<1x72x1024xf32>
    %2 = vector.shape_cast %1 : vector<1x72x1024xf32> to vector<72x1024xf32>
    %cst = arith.constant dense<0.000000e+00> : vector<8x1024xf32>
    %3 = tpu.matmul %0, %2, %cst {dimension_numbers = #tpu.dot_dimension_numbers<[1], [0], [0], [1], [0, 0, 1, 1], [], []>} : vector<8x72xf32>, vector<72x1024xf32>, vector<8x1024xf32> -> vector<8x1024xf32>
    %c0_4 = arith.constant 0 : index
    %c0_5 = arith.constant 0 : index
    %4 = vector.load %arg3[%c0_4, %c0_5] : memref<8x1xf32, #tpu.memory_space<vmem>>, vector<8x1xf32>
    %5 = vector.broadcast %4 : vector<8x1xf32> to vector<8x1024xf32>
    %6 = arith.addf %3, %5 : vector<8x1024xf32>
    %cst_6 = arith.constant 5.000000e-01 : f32
    %7 = vector.broadcast %cst_6 : f32 to vector<8x1024xf32>
    %8 = arith.mulf %7, %6 : vector<8x1024xf32>
    %cst_7 = arith.constant 0.707106769 : f32
    %9 = vector.broadcast %cst_7 : f32 to vector<8x1024xf32>
    %10 = arith.mulf %6, %9 : vector<8x1024xf32>
    %11 = math.erf %10 : vector<8x1024xf32>
    %cst_8 = arith.constant 1.000000e+00 : f32
    %12 = vector.broadcast %cst_8 : f32 to vector<8x1024xf32>
    %13 = arith.addf %12, %11 : vector<8x1024xf32>
    %14 = arith.mulf %8, %13 : vector<8x1024xf32>
    %c0_9 = arith.constant 0 : index
    %c0_10 = arith.constant 0 : index
    %c0_11 = arith.constant 0 : index
    %15 = vector.load %arg4[%c0_9, %c0_10, %c0_11] : memref<1x8x1024xf32, #tpu.memory_space<vmem>>, vector<1x8x1024xf32>
    %16 = vector.shape_cast %15 : vector<1x8x1024xf32> to vector<8x1024xf32>
    %17 = vector.shape_cast %14 : vector<8x1024xf32> to vector<1x8x1024xf32>
    tpu.vector_store %arg4[%c0_9, %c0_10, %c0_11], %17 {strides = array<i32>} : memref<1x8x1024xf32, #tpu.memory_space<vmem>>, vector<1x8x1024xf32>,
    return
  }
  func.func @transform_0(%arg0: i32) -> (i32, i32, i32) {
    %c0_i32 = arith.constant 0 : i32
    %c0_i32_0 = arith.constant 0 : i32
    %c0_i32_1 = arith.constant 0 : i32
    return %arg0, %c0_i32, %c0_i32_0 : i32, i32, i32
  }
  func.func @transform_1(%arg0: i32) -> (i32, i32) {
    %c0_i32 = arith.constant 0 : i32
    %c0_i32_0 = arith.constant 0 : i32
    %c0_i32_1 = arith.constant 0 : i32
    return %c0_i32, %c0_i32_0 : i32, i32
  }
  func.func @transform_2(%arg0: i32) -> (i32, i32) {
    %c0_i32 = arith.constant 0 : i32
    %c0_i32_0 = arith.constant 0 : i32
    %c0_i32_1 = arith.constant 0 : i32
    return %c0_i32, %c0_i32_0 : i32, i32
  }
  func.func @transform_3(%arg0: i32) -> (i32, i32, i32) {
    %c0_i32 = arith.constant 0 : i32
    %c0_i32_0 = arith.constant 0 : i32
    %c0_i32_1 = arith.constant 0 : i32
    return %arg0, %c0_i32, %c0_i32_0 : i32, i32, i32
  }
}

</mosaic_0001>

<llo_original>
// kernel: tpu_custom_call.1
$region0: #{tpu_custom_call.1}
  #allocation0 [shape = 'u32[]', space=smem, size = 0x4, offset = 0x4, fixed_abs, tag = 'smem constant byte address 0x4 - core index']
  #allocation1 [shape = 'u32[144,128]{1,0:T(1,128)}', space=vmem, size = 0x12000, scoped, tag = 'internal scratch']
  %s0 = inlined_call_operand.hbm [shape: f32[2,72,1024], index: 0, kind: input, shape index: {}]
  %s1 = inlined_call_operand.vmem [shape: f32[8,72], index: 1, kind: input, shape index: {}]
  %s2 = inlined_call_operand.vmem [shape: f32[8,1], index: 2, kind: input, shape index: {}]
  %s3 = inlined_call_operand.hbm [shape: f32[2,8,1024], index: 3, kind: output, shape index: {}]
  %s4 = sld [smem:[#allocation0]]
  $region49: #{tpu_custom_call.1} parent=0
    _
  %s6 = ssub.s32 1, %s4
  %s7 = scalar_select 0, %s6, %s4
  $region1: #{tpu_custom_call.1} parent=0
    #allocation2 [shape = 'u8[589824]{0}', space=vmem, size = 0x90000, scoped, tag = 'input window, operand 0']
    #allocation3 [shape = 's32[2]{0}', space=sflag, size = 0x8, scoped, tag = 'scoped memory for tpu_custom_call.1']
    #allocation4 [shape = 's32[2]{0}', space=sflag, size = 0x8, scoped, tag = 'scoped memory for tpu_custom_call.1']
    #allocation5 [shape = 'u8[65536]{0}', space=vmem, size = 0x10000, scoped, tag = 'output window, operand 0']
    %8 = vsyncpa [#allocation3], 0
    %s9 = scalar_lea.sflag [#allocation3], 1
    %10 = vsyncpa %s9, 0
    %11 = vsyncpa [#allocation4], 0
    %s12 = scalar_lea.sflag [#allocation4], 1
    %13 = vsyncpa %s12, 0
    loop: start=0, step=1, limit=4
    $region2: #{tpu_custom_call.1} parent=1 // loop_pre_header
      _
    $region3: #{tpu_custom_call.1} parent=1 // loop_header
      %s15 = sphi 0, %s19
      %p16 = scmp.ge.s32.totalorder %s15, 4
      %s25 = sphi 0, %s27
      %s28 = sphi 0, %s25
      %s29 = sphi 0, %s28
      %s45 = sphi 0, %s29
      %s49 = sphi 0, %s49
      %s51 = sphi 0, %s49
      %s52 = sphi 0, %s51
      %s66 = sphi 0, %s52
      %s70 = sphi 0, %s70
      %s72 = sphi 0, %s70
      %s73 = sphi 0, %s72
      %s87 = sphi 0, %s73
      %s93 = sphi 0, %s95
      %s96 = sphi 0, %s93
      %s97 = sphi 0, %s96
      %s113 = sphi 0, %s97
    $region4: #{tpu_custom_call.1} parent=1 // loop_header_branch
      %18 = sbr.rel (%p16) target = $region8
    $region5: #{tpu_custom_call.1} parent=1 // loop_body
      %s20 = ssub.s32 %s15, 1
      %s21 = ssub.s32 %s15, 2
      %s22 = sadd.s32 %s15, 1
      %s23 = ssub.s32 %s15, %s22
      %p24 = scmp.eq.s32.totalorder %s23, 0
      %s26 = sadd.s32 %s25, 1
      %s27 = scalar_select %p24, %s25, %s26
      %p30 = pneg %p24
      %p31 = scmp.eq.s32.totalorder %s15, 1
      %p32 = por %p30, %p31
      %p33 = scmp.ne.s32.totalorder %s25, %s28
      %p34 = scmp.eq.s32.totalorder %s15, 0
      %p35 = por %p33, %p34
      %p36 = scmp.ne.s32.totalorder %s25, %s28
      %p37 = scmp.eq.s32.totalorder %s20, 1
      %p38 = por %p36, %p37
      %p39 = scmp.ne.s32.totalorder %s28, %s29
      %p40 = scmp.eq.s32.totalorder %s20, 0
      %p41 = por %p39, %p40
      %p42 = scmp.ne.s32.totalorder %s28, %s29
      %p43 = scmp.eq.s32.totalorder %s21, 1
      %p44 = por %p42, %p43
      %p46 = scmp.ne.s32.totalorder %s29, %s45
      %p47 = scmp.eq.s32.totalorder %s21, 0
      %p48 = por %p46, %p47
      %s50 = sadd.s32 %s49, 1
      %p53 = scmp.eq.s32.totalorder %s15, 1
      %p54 = scmp.ne.s32.totalorder %s49, %s51
      %p55 = scmp.eq.s32.totalorder %s15, 0
      %p56 = por %p54, %p55
      %p57 = scmp.ne.s32.totalorder %s49, %s51
      %p58 = scmp.eq.s32.totalorder %s20, 1
      %p59 = por %p57, %p58
      %p60 = scmp.ne.s32.totalorder %s51, %s52
      %p61 = scmp.eq.s32.totalorder %s20, 0
      %p62 = por %p60, %p61
      %p63 = scmp.ne.s32.totalorder %s51, %s52
      %p64 = scmp.eq.s32.totalorder %s21, 1
      %p65 = por %p63, %p64
      %p67 = scmp.ne.s32.totalorder %s52, %s66
      %p68 = scmp.eq.s32.totalorder %s21, 0
      %p69 = por %p67, %p68
      %s71 = sadd.s32 %s70, 1
      %p74 = scmp.eq.s32.totalorder %s15, 1
      %p75 = scmp.ne.s32.totalorder %s70, %s72
      %p76 = scmp.eq.s32.totalorder %s15, 0
      %p77 = por %p75, %p76
      %p78 = scmp.ne.s32.totalorder %s70, %s72
      %p79 = scmp.eq.s32.totalorder %s20, 1
      %p80 = por %p78, %p79
      %p81 = scmp.ne.s32.totalorder %s72, %s73
      %p82 = scmp.eq.s32.totalorder %s20, 0
      %p83 = por %p81, %p82
      %p84 = scmp.ne.s32.totalorder %s72, %s73
      %p85 = scmp.eq.s32.totalorder %s21, 1
      %p86 = por %p84, %p85
      %p88 = scmp.ne.s32.totalorder %s73, %s87
      %p89 = scmp.eq.s32.totalorder %s21, 0
      %p90 = por %p88, %p89
      %s91 = ssub.s32 %s15, %s22
      %p92 = scmp.eq.s32.totalorder %s91, 0
      %s94 = sadd.s32 %s93, 1
      %s95 = scalar_select %p92, %s93, %s94
      %p98 = pneg %p92
      %p99 = scmp.eq.s32.totalorder %s15, 1
      %p100 = por %p98, %p99
      %p101 = scmp.ne.s32.totalorder %s93, %s96
      %p102 = scmp.eq.s32.totalorder %s15, 0
      %p103 = por %p101, %p102
      %p104 = scmp.ne.s32.totalorder %s93, %s96
      %p105 = scmp.eq.s32.totalorder %s20, 1
      %p106 = por %p104, %p105
      %p107 = scmp.ne.s32.totalorder %s96, %s97
      %p108 = scmp.eq.s32.totalorder %s20, 0
      %p109 = por %p107, %p108
      %p110 = scmp.ne.s32.totalorder %s96, %s97
      %p111 = scmp.eq.s32.totalorder %s21, 1
      %p112 = por %p110, %p111
      %p114 = scmp.ne.s32.totalorder %s97, %s113
      %p115 = scmp.eq.s32.totalorder %s21, 0
      %p116 = por %p114, %p115
      %p117 = scmp.le.s32.totalorder 1, %s15
      %p118 = scmp.lt.s32.totalorder %s15, 3
      %p119 = pnand %p117, %p118
      %p120 = pneg %p119
      // Predicated region
      $region9: #{tpu_custom_call.1} parent=5 // pred_check
        _
      $region10: #{tpu_custom_call.1} parent=5 // pred_check_branch
        %122 = sbr.rel (%p119) target = $region12
      $region11: #{tpu_custom_call.1} parent=5 // pred_region
        %s123 = ssub.s32 %s15, 1
        // Predicated region
        $region13: #{tpu_custom_call.1} parent=11 // pred_check
          %p124 = pneg %p62
        $region14: #{tpu_custom_call.1} parent=11 // pred_check_branch
          %126 = sbr.rel (%p124) target = $region16
        $region15: #{tpu_custom_call.1} parent=11 // pred_region
          _
        $region16: #{tpu_custom_call.1} parent=11 // pred_fallthru
          _
        // Predicated region
        $region17: #{tpu_custom_call.1} parent=11 // pred_check
          %p127 = pneg %p83
        $region18: #{tpu_custom_call.1} parent=11 // pred_check_branch
          %129 = sbr.rel (%p127) target = $region20
        $region19: #{tpu_custom_call.1} parent=11 // pred_region
          _
        $region20: #{tpu_custom_call.1} parent=11 // pred_fallthru
          _
      $region12: #{tpu_custom_call.1} parent=5 // pred_fallthru
        _
      %p130 = scmp.lt.s32.totalorder %s15, 2
      // Predicated region
      $region21: #{tpu_custom_call.1} parent=5 // pred_check
        %p131 = pneg %p130
      $region22: #{tpu_custom_call.1} parent=5 // pred_check_branch
        %133 = sbr.rel (%p131) target = $region24
      $region23: #{tpu_custom_call.1} parent=5 // pred_region
        // Predicated region
        $region25: #{tpu_custom_call.1} parent=23 // pred_check
          %p134 = pneg %p35
        $region26: #{tpu_custom_call.1} parent=23 // pred_check_branch
          %136 = sbr.rel (%p134) target = $region28
        $region27: #{tpu_custom_call.1} parent=23 // pred_region
          %s137 = sand.u32 %s25, 1
          %s138 = scalar_lea.sflag [#allocation3], %s137
          %s139 = sand.u32 %s25, 1
          %s140 = smul.addr %s139, 576
          %s141 = scalar_lea.vmem [#allocation2], %s140
          %s143 = ssub.s32 9216, 9216
          %144 = vsyncadd %s138, %s143
          %s145 = smul.addr %s15, 72
          %s146 = smul.addr %s145, 128
          %s147 = scalar_lea.hbm %s0, %s146
          %s148 = sshll.u32 %s141, 4
          %s149 = int_to_ptr.vmem [resolvable:$true] %s148
          %154 = dma.hbm_to_vmem [thread:$0]  %s147, 9216, %s149, %s138, 1024, 1024, 64
        $region28: #{tpu_custom_call.1} parent=23 // pred_fallthru
          _
      $region24: #{tpu_custom_call.1} parent=5 // pred_fallthru
        _
      %p155 = scmp.le.s32.totalorder 1, %s15
      %p156 = scmp.lt.s32.totalorder %s15, 3
      %p157 = pnand %p155, %p156
      %p158 = pneg %p157
      // Predicated region
      $region29: #{tpu_custom_call.1} parent=5 // pred_check
        _
      $region30: #{tpu_custom_call.1} parent=5 // pred_check_branch
        %160 = sbr.rel (%p157) target = $region32
      $region31: #{tpu_custom_call.1} parent=5 // pred_region
        %s161 = ssub.s32 %s15, 1
        %s162 = sand.u32 %s28, 1
        %s163 = scalar_lea.sflag [#allocation3], %s162
        %s164 = sand.u32 %s28, 1
        %s165 = smul.addr %s164, 576
        %s166 = scalar_lea.vmem [#allocation2], %s165
        // Predicated region
        $region33: #{tpu_custom_call.1} parent=31 // pred_check
          %p167 = pneg %p41
        $region34: #{tpu_custom_call.1} parent=31 // pred_check_branch
          %169 = sbr.rel (%p167) target = $region36
        $region35: #{tpu_custom_call.1} parent=31 // pred_region
          %170 = dma.done %s163, 9216
        $region36: #{tpu_custom_call.1} parent=31 // pred_fallthru
          _
        %s171 = sand.u32 %s28, 1
        %s172 = scalar_lea.sflag [#allocation3], %s171
        %s173 = sand.u32 %s28, 1
        %s174 = smul.addr %s173, 576
        %s175 = scalar_lea.vmem [#allocation2], %s174
        %p176 = pneg %p41
        %p177 = pneg %p38
        %p178 = pneg %p62
        %p179 = pneg %p59
        %p180 = pneg %p83
        %p181 = pneg %p80
        %p182 = pneg %p109
        %p183 = pneg %p106
        %s184 = sand.u32 %s96, 1
        %s185 = scalar_lea.sflag [#allocation4], %s184
        %s186 = sand.u32 %s96, 1
        %s187 = smul.addr %s186, 64
        %s188 = scalar_lea.vmem [#allocation5], %s187
        %v189 = vld [vmem:[%s1] sm:$0xff]
        %v190 = vld [vmem:[%s166] sm:$0xff]
        %v191 = vld [vmem:[%s166 + $0x8] sm:$0xff]
        %v192 = vld [vmem:[%s166 + $0x10] sm:$0xff]
        %v193 = vld [vmem:[%s166 + $0x18] sm:$0xff]
        %v194 = vld [vmem:[%s166 + $0x20] sm:$0xff]
        %v195 = vld [vmem:[%s166 + $0x28] sm:$0xff]
        %v196 = vld [vmem:[%s166 + $0x30] sm:$0xff]
        %v197 = vld [vmem:[%s166 + $0x38] sm:$0xff]
        %v198 = vld [vmem:[%s166 + $0x40] sm:$0xff]
        %v199 = vld [vmem:[%s166 + $0x48] sm:$0xff]
        %v200 = vld [vmem:[%s166 + $0x50] sm:$0xff]
        %v201 = vld [vmem:[%s166 + $0x58] sm:$0xff]
        %v202 = vld [vmem:[%s166 + $0x60] sm:$0xff]
        %v203 = vld [vmem:[%s166 + $0x68] sm:$0xff]
        %v204 = vld [vmem:[%s166 + $0x70] sm:$0xff]
        %v205 = vld [vmem:[%s166 + $0x78] sm:$0xff]
        %v206 = vld [vmem:[%s166 + $0x80] sm:$0xff]
        %v207 = vld [vmem:[%s166 + $0x88] sm:$0xff]
        %v208 = vld [vmem:[%s166 + $0x90] sm:$0xff]
        %v209 = vld [vmem:[%s166 + $0x98] sm:$0xff]
        %v210 = vld [vmem:[%s166 + $0xa0] sm:$0xff]
        %v211 = vld [vmem:[%s166 + $0xa8] sm:$0xff]
        %v212 = vld [vmem:[%s166 + $0xb0] sm:$0xff]
        %v213 = vld [vmem:[%s166 + $0xb8] sm:$0xff]
        %v214 = vld [vmem:[%s166 + $0xc0] sm:$0xff]
        %v215 = vld [vmem:[%s166 + $0xc8] sm:$0xff]
        %v216 = vld [vmem:[%s166 + $0xd0] sm:$0xff]
        %v217 = vld [vmem:[%s166 + $0xd8] sm:$0xff]
        %v218 = vld [vmem:[%s166 + $0xe0] sm:$0xff]
        %v219 = vld [vmem:[%s166 + $0xe8] sm:$0xff]
        %v220 = vld [vmem:[%s166 + $0xf0] sm:$0xff]
        %v221 = vld [vmem:[%s166 + $0xf8] sm:$0xff]
        %v222 = vld [vmem:[%s166 + $0x100] sm:$0xff]
        %v223 = vld [vmem:[%s166 + $0x108] sm:$0xff]
        %v224 = vld [vmem:[%s166 + $0x110] sm:$0xff]
        %v225 = vld [vmem:[%s166 + $0x118] sm:$0xff]
        %v226 = vld [vmem:[%s166 + $0x120] sm:$0xff]
        %v227 = vld [vmem:[%s166 + $0x128] sm:$0xff]
        %v228 = vld [vmem:[%s166 + $0x130] sm:$0xff]
        %v229 = vld [vmem:[%s166 + $0x138] sm:$0xff]
        %v230 = vld [vmem:[%s166 + $0x140] sm:$0xff]
        %v231 = vld [vmem:[%s166 + $0x148] sm:$0xff]
        %v232 = vld [vmem:[%s166 + $0x150] sm:$0xff]
        %v233 = vld [vmem:[%s166 + $0x158] sm:$0xff]
        %v234 = vld [vmem:[%s166 + $0x160] sm:$0xff]
        %v235 = vld [vmem:[%s166 + $0x168] sm:$0xff]
        %v236 = vld [vmem:[%s166 + $0x170] sm:$0xff]
        %v237 = vld [vmem:[%s166 + $0x178] sm:$0xff]
        %v238 = vld [vmem:[%s166 + $0x180] sm:$0xff]
        %v239 = vld [vmem:[%s166 + $0x188] sm:$0xff]
        %v240 = vld [vmem:[%s166 + $0x190] sm:$0xff]
        %v241 = vld [vmem:[%s166 + $0x198] sm:$0xff]
        %v242 = vld [vmem:[%s166 + $0x1a0] sm:$0xff]
        %v243 = vld [vmem:[%s166 + $0x1a8] sm:$0xff]
        %v244 = vld [vmem:[%s166 + $0x1b0] sm:$0xff]
        %v245 = vld [vmem:[%s166 + $0x1b8] sm:$0xff]
        %v246 = vld [vmem:[%s166 + $0x1c0] sm:$0xff]
        %v247 = vld [vmem:[%s166 + $0x1c8] sm:$0xff]
        %v248 = vld [vmem:[%s166 + $0x1d0] sm:$0xff]
        %v249 = vld [vmem:[%s166 + $0x1d8] sm:$0xff]
        %v250 = vld [vmem:[%s166 + $0x1e0] sm:$0xff]
        %v251 = vld [vmem:[%s166 + $0x1e8] sm:$0xff]
        %v252 = vld [vmem:[%s166 + $0x1f0] sm:$0xff]
        %v253 = vld [vmem:[%s166 + $0x1f8] sm:$0xff]
        %v254 = vld [vmem:[%s166 + $0x200] sm:$0xff]
        %v255 = vld [vmem:[%s166 + $0x208] sm:$0xff]
        %v256 = vld [vmem:[%s166 + $0x210] sm:$0xff]
        %v257 = vld [vmem:[%s166 + $0x218] sm:$0xff]
        %v258 = vld [vmem:[%s166 + $0x220] sm:$0xff]
        %v259 = vld [vmem:[%s166 + $0x228] sm:$0xff]
        %v260 = vld [vmem:[%s166 + $0x230] sm:$0xff]
        %v261 = vld [vmem:[%s166 + $0x238] sm:$0xff]
        %v262 = vld [vmem:[%s2] sm:$0xff]
        %264 = vset.pattern.permute.xlu0 0
        %265 = vperm.xlu0 %264, %v262
        %v266 = vpop.permute.xlu0 %265
        %vm268 = vcmask 588800
        %v270 = vsel %vm268, %v189, 0
        %272 = vmatprep.subr.mxu0 %v191
        %273 = vmatpush1.msra.mxu0 %v190
        %274 = vmatprep.subr.mxu0 %v199
        %275 = vmatpush1.msra.mxu0 %v198
        %276 = vmatprep.subr.mxu0 %v207
        %277 = vmatpush1.msra.mxu0 %v206
        %278 = vmatprep.subr.mxu0 %v215
        %279 = vmatpush1.msra.mxu0 %v214
        %280 = vmatprep.subr.mxu0 %v223
        %281 = vmatpush1.msra.mxu0 %v222
        %282 = vmatprep.subr.mxu0 %v231
        %283 = vmatpush1.msra.mxu0 %v230
        %284 = vmatprep.subr.mxu0 %v239
        %285 = vmatpush1.msra.mxu0 %v238
        %286 = vmatprep.subr.mxu0 %v247
        %287 = vmatpush1.msra.mxu0 %v246
        %288 = vmatprep.subr.mxu0 %v255
        %289 = vmatpush1.msra.mxu0 %v254
        %290 = vmatprep.subr.mxu0 0.0
        %291 = vmatpush1.msra.mxu0 0.0
        %292 = vmatprep.subr.mxu0 0.0
        %293 = vmatpush1.msra.mxu0 0.0
        %294 = vmatprep.subr.mxu0 0.0
        %295 = vmatpush1.msra.mxu0 0.0
        %296 = vmatprep.subr.mxu0 0.0
        %297 = vmatpush1.msra.mxu0 0.0
        %298 = vmatprep.subr.mxu0 0.0
        %299 = vmatpush1.msra.mxu0 0.0
        %300 = vmatprep.subr.mxu0 0.0
        %301 = vmatpush1.msra.mxu0 0.0
        %302 = vmatprep.subr.mxu0 0.0
        %303 = vmatpush1.msra.mxu0 0.0
        %304 = vmatprep.subr.mxu0 0.0
        %305 = vmatpush1.msra.mxu0 0.0
        %306 = vmatprep.subr.mxu0 0.0
        %307 = vmatpush1.msra.mxu0 0.0
        %308 = vmatprep.subr.mxu0 0.0
        %309 = vmatpush1.msra.mxu0 0.0
        %310 = vmatprep.subr.mxu0 0.0
        %311 = vmatpush1.msra.mxu0 0.0
        %312 = vmatprep.subr.mxu0 0.0
        %313 = vmatpush1.msra.mxu0 0.0
        %314 = vmatprep.subr.mxu0 0.0
        %315 = vmatpush1.msra.mxu0 0.0
        %316 = vmatprep.subr.mxu0 0.0
        %317 = vmatpush1.msra.mxu0 0.0
        %318 = vmatprep.subr.mxu0 0.0
        %319 = vmatpush1.msra.mxu0 0.0
        %320 = vmatprep.subr.mxu0 0.0
        %321 = vmatpush1.msra.mxu0 0.0
        %322 = vmatprep.subr.mxu0 0.0
        %323 = vmatpush1.msra.mxu0 0.0
        %324 = vmatprep.subr.mxu0 0.0
        %325 = vmatpush1.msra.mxu0 0.0
        %326 = vmatprep.subr.mxu0 0.0
        %327 = vmatpush1.msra.mxu0 0.0
        %328 = vmatprep.subr.mxu0 0.0
        %329 = vmatpush1.msra.mxu0 0.0
        %330 = vmatprep.subr.mxu0 0.0
        %331 = vmatpush1.msra.mxu0 0.0
        %332 = vmatprep.subr.mxu0 0.0
        %333 = vmatpush1.msra.mxu0 0.0
        %334 = vmatprep.subr.mxu0 0.0
        %335 = vmatpush1.msra.mxu0 0.0
        %336 = vmatprep.mubr.f32.mxu0 0.0
        %337 = vmatmul.mubr.f32.gmra.mrb[0].mxu0 %v270
        %v338 = vpop.f32.mrb[0].mxu0
        %v339 = vadd.f32 %v266, %v338
        %v340 = vpop.f32.mrb[0].mxu0
        %v341 = vadd.f32 %v266, %v340
        %342 = vdwg.mxu0
        %343 = vmatprep.subr.mxu0 %v193
        %344 = vmatpush1.msra.mxu0 %v192
        %345 = vmatprep.subr.mxu0 %v201
        %346 = vmatpush1.msra.mxu0 %v200
        %347 = vmatprep.subr.mxu0 %v209
        %348 = vmatpush1.msra.mxu0 %v208
        %349 = vmatprep.subr.mxu0 %v217
        %350 = vmatpush1.msra.mxu0 %v216
        %351 = vmatprep.subr.mxu0 %v225
        %352 = vmatpush1.msra.mxu0 %v224
        %353 = vmatprep.subr.mxu0 %v233
        %354 = vmatpush1.msra.mxu0 %v232
        %355 = vmatprep.subr.mxu0 %v241
        %356 = vmatpush1.msra.mxu0 %v240
        %357 = vmatprep.subr.mxu0 %v249
        %358 = vmatpush1.msra.mxu0 %v248
        %359 = vmatprep.subr.mxu0 %v257
        %360 = vmatpush1.msra.mxu0 %v256
        %361 = vmatprep.subr.mxu0 0.0
        %362 = vmatpush1.msra.mxu0 0.0
        %363 = vmatprep.subr.mxu0 0.0
        %364 = vmatpush1.msra.mxu0 0.0
        %365 = vmatprep.subr.mxu0 0.0
        %366 = vmatpush1.msra.mxu0 0.0
        %367 = vmatprep.subr.mxu0 0.0
        %368 = vmatpush1.msra.mxu0 0.0
        %369 = vmatprep.subr.mxu0 0.0
        %370 = vmatpush1.msra.mxu0 0.0
        %371 = vmatprep.subr.mxu0 0.0
        %372 = vmatpush1.msra.mxu0 0.0
        %373 = vmatprep.subr.mxu0 0.0
        %374 = vmatpush1.msra.mxu0 0.0
        %375 = vmatprep.subr.mxu0 0.0
        %376 = vmatpush1.msra.mxu0 0.0
        %377 = vmatprep.subr.mxu0 0.0
        %378 = vmatpush1.msra.mxu0 0.0
        %379 = vmatprep.subr.mxu0 0.0
        %380 = vmatpush1.msra.mxu0 0.0
        %381 = vmatprep.subr.mxu0 0.0
        %382 = vmatpush1.msra.mxu0 0.0
        %383 = vmatprep.subr.mxu0 0.0
        %384 = vmatpush1.msra.mxu0 0.0
        %385 = vmatprep.subr.mxu0 0.0
        %386 = vmatpush1.msra.mxu0 0.0
        %387 = vmatprep.subr.mxu0 0.0
        %388 = vmatpush1.msra.mxu0 0.0
        %389 = vmatprep.subr.mxu0 0.0
        %390 = vmatpush1.msra.mxu0 0.0
        %391 = vmatprep.subr.mxu0 0.0
        %392 = vmatpush1.msra.mxu0 0.0
        %393 = vmatprep.subr.mxu0 0.0
        %394 = vmatpush1.msra.mxu0 0.0
        %395 = vmatprep.subr.mxu0 0.0
        %396 = vmatpush1.msra.mxu0 0.0
        %397 = vmatprep.subr.mxu0 0.0
        %398 = vmatpush1.msra.mxu0 0.0
        %399 = vmatprep.subr.mxu0 0.0
        %400 = vmatpush1.msra.mxu0 0.0
        %401 = vmatprep.subr.mxu0 0.0
        %402 = vmatpush1.msra.mxu0 0.0
        %403 = vmatprep.subr.mxu0 0.0
        %404 = vmatpush1.msra.mxu0 0.0
        %405 = vmatprep.subr.mxu0 0.0
        %406 = vmatpush1.msra.mxu0 0.0
        %407 = vmatprep.mubr.f32.mxu0 0.0
        %408 = vmatmul.mubr.f32.gmra.mrb[0].mxu0 %v270
        %v409 = vpop.f32.mrb[0].mxu0
        %v410 = vadd.f32 %v266, %v409
        %v411 = vpop.f32.mrb[0].mxu0
        %v412 = vadd.f32 %v266, %v411
        %413 = vdwg.mxu0
        %414 = vmatprep.subr.mxu0 %v195
        %415 = vmatpush1.msra.mxu0 %v194
        %416 = vmatprep.subr.mxu0 %v203
        %417 = vmatpush1.msra.mxu0 %v202
        %418 = vmatprep.subr.mxu0 %v211
        %419 = vmatpush1.msra.mxu0 %v210
        %420 = vmatprep.subr.mxu0 %v219
        %421 = vmatpush1.msra.mxu0 %v218
        %422 = vmatprep.subr.mxu0 %v227
        %423 = vmatpush1.msra.mxu0 %v226
        %424 = vmatprep.subr.mxu0 %v235
        %425 = vmatpush1.msra.mxu0 %v234
        %426 = vmatprep.subr.mxu0 %v243
        %427 = vmatpush1.msra.mxu0 %v242
        %428 = vmatprep.subr.mxu0 %v251
        %429 = vmatpush1.msra.mxu0 %v250
        %430 = vmatprep.subr.mxu0 %v259
        %431 = vmatpush1.msra.mxu0 %v258
        %432 = vmatprep.subr.mxu0 0.0
        %433 = vmatpush1.msra.mxu0 0.0
        %434 = vmatprep.subr.mxu0 0.0
        %435 = vmatpush1.msra.mxu0 0.0
        %436 = vmatprep.subr.mxu0 0.0
        %437 = vmatpush1.msra.mxu0 0.0
        %438 = vmatprep.subr.mxu0 0.0
        %439 = vmatpush1.msra.mxu0 0.0
        %440 = vmatprep.subr.mxu0 0.0
        %441 = vmatpush1.msra.mxu0 0.0
        %442 = vmatprep.subr.mxu0 0.0
        %443 = vmatpush1.msra.mxu0 0.0
        %444 = vmatprep.subr.mxu0 0.0
        %445 = vmatpush1.msra.mxu0 0.0
        %446 = vmatprep.subr.mxu0 0.0
        %447 = vmatpush1.msra.mxu0 0.0
        %448 = vmatprep.subr.mxu0 0.0
        %449 = vmatpush1.msra.mxu0 0.0
        %450 = vmatprep.subr.mxu0 0.0
        %451 = vmatpush1.msra.mxu0 0.0
        %452 = vmatprep.subr.mxu0 0.0
        %453 = vmatpush1.msra.mxu0 0.0
        %454 = vmatprep.subr.mxu0 0.0
        %455 = vmatpush1.msra.mxu0 0.0
        %456 = vmatprep.subr.mxu0 0.0
        %457 = vmatpush1.msra.mxu0 0.0
        %458 = vmatprep.subr.mxu0 0.0
        %459 = vmatpush1.msra.mxu0 0.0
        %460 = vmatprep.subr.mxu0 0.0
        %461 = vmatpush1.msra.mxu0 0.0
        %462 = vmatprep.subr.mxu0 0.0
        %463 = vmatpush1.msra.mxu0 0.0
        %464 = vmatprep.subr.mxu0 0.0
        %465 = vmatpush1.msra.mxu0 0.0
        %466 = vmatprep.subr.mxu0 0.0
        %467 = vmatpush1.msra.mxu0 0.0
        %468 = vmatprep.subr.mxu0 0.0
        %469 = vmatpush1.msra.mxu0 0.0
        %470 = vmatprep.subr.mxu0 0.0
        %471 = vmatpush1.msra.mxu0 0.0
        %472 = vmatprep.subr.mxu0 0.0
        %473 = vmatpush1.msra.mxu0 0.0
        %474 = vmatprep.subr.mxu0 0.0
        %475 = vmatpush1.msra.mxu0 0.0
        %476 = vmatprep.subr.mxu0 0.0
        %477 = vmatpush1.msra.mxu0 0.0
        %478 = vmatprep.mubr.f32.mxu0 0.0
        %479 = vmatmul.mubr.f32.gmra.mrb[0].mxu0 %v270
        %v480 = vpop.f32.mrb[0].mxu0
        %v481 = vadd.f32 %v266, %v480
        %v482 = vpop.f32.mrb[0].mxu0
        %v483 = vadd.f32 %v266, %v482
        %484 = vdwg.mxu0
        %485 = vmatprep.subr.mxu0 %v197
        %486 = vmatpush1.msra.mxu0 %v196
        %487 = vmatprep.subr.mxu0 %v205
        %488 = vmatpush1.msra.mxu0 %v204
        %489 = vmatprep.subr.mxu0 %v213
        %490 = vmatpush1.msra.mxu0 %v212
        %491 = vmatprep.subr.mxu0 %v221
        %492 = vmatpush1.msra.mxu0 %v220
        %493 = vmatprep.subr.mxu0 %v229
        %494 = vmatpush1.msra.mxu0 %v228
        %495 = vmatprep.subr.mxu0 %v237
        %496 = vmatpush1.msra.mxu0 %v236
        %497 = vmatprep.subr.mxu0 %v245
        %498 = vmatpush1.msra.mxu0 %v244
        %499 = vmatprep.subr.mxu0 %v253
        %500 = vmatpush1.msra.mxu0 %v252
        %501 = vmatprep.subr.mxu0 %v261
        %502 = vmatpush1.msra.mxu0 %v260
        %503 = vmatprep.subr.mxu0 0.0
        %504 = vmatpush1.msra.mxu0 0.0
        %505 = vmatprep.subr.mxu0 0.0
        %506 = vmatpush1.msra.mxu0 0.0
        %507 = vmatprep.subr.mxu0 0.0
        %508 = vmatpush1.msra.mxu0 0.0
        %509 = vmatprep.subr.mxu0 0.0
        %510 = vmatpush1.msra.mxu0 0.0
        %511 = vmatprep.subr.mxu0 0.0
        %512 = vmatpush1.msra.mxu0 0.0
        %513 = vmatprep.subr.mxu0 0.0
        %514 = vmatpush1.msra.mxu0 0.0
        %515 = vmatprep.subr.mxu0 0.0
        %516 = vmatpush1.msra.mxu0 0.0
        %517 = vmatprep.subr.mxu0 0.0
        %518 = vmatpush1.msra.mxu0 0.0
        %519 = vmatprep.subr.mxu0 0.0
        %520 = vmatpush1.msra.mxu0 0.0
        %521 = vmatprep.subr.mxu0 0.0
        %522 = vmatpush1.msra.mxu0 0.0
        %523 = vmatprep.subr.mxu0 0.0
        %524 = vmatpush1.msra.mxu0 0.0
        %525 = vmatprep.subr.mxu0 0.0
        %526 = vmatpush1.msra.mxu0 0.0
        %527 = vmatprep.subr.mxu0 0.0
        %528 = vmatpush1.msra.mxu0 0.0
        %529 = vmatprep.subr.mxu0 0.0
        %530 = vmatpush1.msra.mxu0 0.0
        %531 = vmatprep.subr.mxu0 0.0
        %532 = vmatpush1.msra.mxu0 0.0
        %533 = vmatprep.subr.mxu0 0.0
        %534 = vmatpush1.msra.mxu0 0.0
        %535 = vmatprep.subr.mxu0 0.0
        %536 = vmatpush1.msra.mxu0 0.0
        %537 = vmatprep.subr.mxu0 0.0
        %538 = vmatpush1.msra.mxu0 0.0
        %539 = vmatprep.subr.mxu0 0.0
        %540 = vmatpush1.msra.mxu0 0.0
        %541 = vmatprep.subr.mxu0 0.0
        %542 = vmatpush1.msra.mxu0 0.0
        %543 = vmatprep.subr.mxu0 0.0
        %544 = vmatpush1.msra.mxu0 0.0
        %545 = vmatprep.subr.mxu0 0.0
        %546 = vmatpush1.msra.mxu0 0.0
        %547 = vmatprep.subr.mxu0 0.0
        %548 = vmatpush1.msra.mxu0 0.0
        %549 = vmatprep.mubr.f32.mxu0 0.0
        %550 = vmatmul.mubr.f32.gmra.mrb[0].mxu0 %v270
        %v551 = vpop.f32.mrb[0].mxu0
        %v552 = vadd.f32 %v266, %v551
        %v553 = vpop.f32.mrb[0].mxu0
        %v554 = vadd.f32 %v266, %v553
        %555 = vdwg.mxu0
        %v556 = vmul.f32 %v339, 0.5
        %v557 = vmul.f32 %v341, 0.5
        %v558 = vmul.f32 %v410, 0.5
        %v559 = vmul.f32 %v412, 0.5
        %v560 = vmul.f32 %v481, 0.5
        %v561 = vmul.f32 %v483, 0.5
        %v562 = vmul.f32 %v552, 0.5
        %v563 = vmul.f32 %v554, 0.5
        %v564 = vmul.f32 %v339, 0.70710677
        %v565 = vmul.f32 %v341, 0.70710677
        %v566 = vmul.f32 %v410, 0.70710677
        %v567 = vmul.f32 %v412, 0.70710677
        %v568 = vmul.f32 %v481, 0.70710677
        %v569 = vmul.f32 %v483, 0.70710677
        %v570 = vmul.f32 %v552, 0.70710677
        %v571 = vmul.f32 %v554, 0.70710677
        %v572 = verf.f32.pop %v564
        %v573 = verf.f32.pop %v565
        %v574 = verf.f32.pop %v566
        %v575 = verf.f32.pop %v567
        %v576 = verf.f32.pop %v568
        %v577 = verf.f32.pop %v569
        %v578 = verf.f32.pop %v570
        %v579 = verf.f32.pop %v571
        %v580 = vadd.f32 %v572, 1.0
        %v581 = vadd.f32 %v573, 1.0
        %v582 = vadd.f32 %v574, 1.0
        %v583 = vadd.f32 %v575, 1.0
        %v584 = vadd.f32 %v576, 1.0
        %v585 = vadd.f32 %v577, 1.0
        %v586 = vadd.f32 %v578, 1.0
        %v587 = vadd.f32 %v579, 1.0
        %v588 = vmul.f32 %v556, %v580
        %v589 = vmul.f32 %v557, %v581
        %v590 = vmul.f32 %v558, %v582
        %v591 = vmul.f32 %v559, %v583
        %v592 = vmul.f32 %v560, %v584
        %v593 = vmul.f32 %v561, %v585
        %v594 = vmul.f32 %v562, %v586
        %v595 = vmul.f32 %v563, %v587
        %596 = vst [vmem:[%s188] sm:$0xff] %v588
        %597 = vst [vmem:[%s188 + $0x8] sm:$0xff] %v589
        %598 = vst [vmem:[%s188 + $0x10] sm:$0xff] %v590
        %599 = vst [vmem:[%s188 + $0x18] sm:$0xff] %v591
        %600 = vst [vmem:[%s188 + $0x20] sm:$0xff] %v592
        %601 = vst [vmem:[%s188 + $0x28] sm:$0xff] %v593
        %602 = vst [vmem:[%s188 + $0x30] sm:$0xff] %v594
        %603 = vst [vmem:[%s188 + $0x38] sm:$0xff] %v595
        %s604 = sand.u32 %s96, 1
        %s605 = scalar_lea.sflag [#allocation4], %s604
        %s606 = sand.u32 %s96, 1
        %s607 = smul.addr %s606, 64
        %s608 = scalar_lea.vmem [#allocation5], %s607
        // Predicated region
        $region37: #{tpu_custom_call.1} parent=31 // pred_check
          %p609 = pneg %p106
        $region38: #{tpu_custom_call.1} parent=31 // pred_check_branch
          %611 = sbr.rel (%p609) target = $region40
        $region39: #{tpu_custom_call.1} parent=31 // pred_region
          %s613 = ssub.s32 1024, 1024
          %614 = vsyncadd %s605, %s613
          %s615 = smul.addr %s20, 8
          %s616 = smul.addr %s615, 128
          %s617 = scalar_lea.hbm %s3, %s616
          %s619 = sshll.u32 %s608, 4
          %s620 = int_to_ptr.vmem [resolvable:$true] %s619
          %622 = dma.vmem_to_hbm [thread:$0]  %s620, 1024, %s617, %s605
        $region40: #{tpu_custom_call.1} parent=31 // pred_fallthru
          _
      $region32: #{tpu_custom_call.1} parent=5 // pred_fallthru
        _
      %p623 = scmp.le.s32.totalorder 2, %s15
      // Predicated region
      $region41: #{tpu_custom_call.1} parent=5 // pred_check
        %p624 = pneg %p623
      $region42: #{tpu_custom_call.1} parent=5 // pred_check_branch
        %626 = sbr.rel (%p624) target = $region44
      $region43: #{tpu_custom_call.1} parent=5 // pred_region
        %s627 = ssub.s32 %s15, 2
        // Predicated region
        $region45: #{tpu_custom_call.1} parent=43 // pred_check
          %p628 = pneg %p112
        $region46: #{tpu_custom_call.1} parent=43 // pred_check_branch
          %630 = sbr.rel (%p628) target = $region48
        $region47: #{tpu_custom_call.1} parent=43 // pred_region
          %s631 = sand.u32 %s97, 1
          %s632 = scalar_lea.sflag [#allocation4], %s631
          %s633 = sand.u32 %s97, 1
          %s634 = smul.addr %s633, 64
          %s635 = scalar_lea.vmem [#allocation5], %s634
          %636 = dma.done %s632, 1024
        $region48: #{tpu_custom_call.1} parent=43 // pred_fallthru
          _
      $region44: #{tpu_custom_call.1} parent=5 // pred_fallthru
        _
    $region6: #{tpu_custom_call.1} parent=1 // loop_footer
      %s19 = sadd.s32 1, %s15
    $region7: #{tpu_custom_call.1} parent=1 // loop_footer_branch
      %14 = sbr.rel target = $region3
    $region8: #{tpu_custom_call.1} parent=1 // loop_exit
      _
    %637 = vsyncpa [#allocation3], 1
    %s638 = scalar_lea.sflag [#allocation3], 1
    %639 = vsyncpa %s638, 1
    %640 = vsyncpa [#allocation4], 1
    %s641 = scalar_lea.sflag [#allocation4], 1
    %642 = vsyncpa %s641, 1

</llo_original>
